<compile_context>
chip_gen: v7x
topology: tpu7x:2x2x1
jax: 0.10.0
libtpu: 0.0.40
codegen_flags: <defaults>
</compile_context>

<pallas_src>
import jax
import jax.numpy as jnp
from jax.experimental import pallas as pl
from jax.experimental.pallas import tpu as pltpu

_LANE = 128     # lane width / MXU alignment for tiled (non-full) block dims
_SUBLANE = 8    # sublane width


def _round_up(n, m):
    return ((n + m - 1) // m) * m


def _vmlp_kernel(x_ref, w1_ref, b1_ref, wh_ref, bh_ref, eps_ref,
                 heads_ref, z_ref):
    """One (batch tile, hidden-chunk) grid step.

    heads_ref (f32, [tile_b, 2Z]) doubles as the accumulator across the
    hidden-chunk axis: logvar occupies lanes [0, Z), mu lanes [Z, 2Z).
    """
    k = pl.program_id(1)

    @pl.when(k == 0)
    def _init():
        heads_ref[...] = jnp.zeros_like(heads_ref)

    # Layer-1 chunk: [tile_b, F] @ [F, tile_h] on the MXU with f32 accumulate;
    # bias add + ReLU stay f32 on the VPU (v5e has no bf16 VPU).
    h = jnp.dot(x_ref[...], w1_ref[...], preferred_element_type=jnp.float32)
    h = jnp.maximum(h + b1_ref[...], 0.0)

    # Fused-heads chunk: accumulate [tile_b, tile_h] @ [tile_h, 2Z] into the
    # resident f32 output block.
    heads_ref[...] += jnp.dot(h.astype(wh_ref.dtype), wh_ref[...],
                              preferred_element_type=jnp.float32)

    @pl.when(k == pl.num_programs(1) - 1)
    def _finalize():
        zdim = z_ref.shape[-1]
        heads = heads_ref[...] + bh_ref[...]
        heads_ref[...] = heads
        logvar = heads[:, :zdim]
        mu = heads[:, zdim:]
        sigma = jnp.exp(0.5 * logvar)                  # EUP
        eps = eps_ref[...].astype(jnp.float32)
        z_ref[...] = (sigma * eps + mu).astype(z_ref.dtype)


def _choose_tiles(B, F, H, Z, in_itemsize, vmem_budget, tile_b, tile_h,
                  single_buffer):
    """Generation-aware tile selection (budget derived from VMEM capacity)."""
    # ---- hidden-dim tile (K-tiling of the head matmul) ----------------------
    if tile_h is None:
        w_bufs = 1 if single_buffer else 2
        full_w = ((F * H + H * 2 * Z) * in_itemsize + (H + 2 * Z) * 4) * w_bufs
        if full_w <= vmem_budget // 3:
            tile_h = H                                   # fully resident weights
        else:
            per_h = ((F + 2 * Z) * in_itemsize + 4) * 2  # streamed -> 2 buffers
            tile_h = max(_LANE, ((vmem_budget // 3) // per_h) // _LANE * _LANE)
    tile_h = min(tile_h, H)
    if tile_h < H:
        tile_h = _round_up(tile_h, _LANE)   # tiled dim must be lane-aligned
        if tile_h >= H:
            tile_h = H
    Hp = H if tile_h == H else _round_up(H, tile_h)
    nh = Hp // tile_h

    # ---- batch tile ----------------------------------------------------------
    w_bufs = 1 if (single_buffer and nh == 1) else 2
    w_bytes = ((F * tile_h + tile_h * 2 * Z) * in_itemsize
               + (tile_h + 2 * Z) * 4) * w_bufs
    if tile_b is None:
        # x + eps tiles (double-buffered) + heads/z f32 outputs (double-buffered)
        per_row = 2 * ((F + Z) * in_itemsize + 3 * Z * 4)
        avail = max(vmem_budget - w_bytes, per_row * _SUBLANE)
        tile_b = min(avail // per_row, 2048)
        if B > _SUBLANE:
            # Keep >= 2 batch steps so the 'parallel' axis can shard across the
            # two TensorCores on v7x (no-op on the single-TC v5e/v6e).
            tile_b = min(tile_b, _round_up(pl.cdiv(B, 2), _SUBLANE))
    if tile_b >= B:
        tile_b = B                                       # single full-array block
    else:
        tile_b = max(_SUBLANE, (tile_b // _SUBLANE) * _SUBLANE)
    return tile_b, tile_h, Hp, nh


def variational_mlp(x, w1, b1, wlv, blv, wmu, bmu, eps, *,
                    compute_dtype=jnp.bfloat16, tile_b=None, tile_h=None,
                    single_buffer_weights=True):
    """Full VariationalMLP forward in one Pallas kernel.

    Weights/biases live in VMEM (single-buffered when fully resident, streamed
    over hidden-dim chunks otherwise); x/eps/outputs are tiled along batch and
    pipelined with automatic double-buffered DMA.
    """
    B, F = x.shape
    H = w1.shape[1]
    Z = wlv.shape[1]
    cdt = jnp.dtype(compute_dtype)
    f32 = jnp.float32

    # Generation-aware VMEM budget (~96 MiB on v5e/v6e, ~48 MiB on v7x).
    try:
        vmem_cap = int(getattr(pltpu.get_tpu_info(), "vmem_capacity_bytes",
                               64 * 1024 * 1024))
    except Exception:
        vmem_cap = 64 * 1024 * 1024
    vmem_budget = int(0.75 * vmem_cap)

    single_buffer = bool(single_buffer_weights) and hasattr(pl, "Buffered")
    tile_b, tile_h, Hp, nh = _choose_tiles(
        B, F, H, Z, cdt.itemsize, vmem_budget, tile_b, tile_h, single_buffer)

    # x / eps ship unpadded (no extra HBM pad pass).  eps travels in the
    # compute dtype to halve its HBM stream when bf16; it is cast back to f32
    # inside the kernel.  (Could be generated in-kernel with pltpu.prng_seed +
    # pltpu.stateful_normal to drop the stream entirely.)
    x_c = x.astype(cdt)
    eps_c = eps.astype(cdt)

    # Fused head weights/biases: [H, 2Z] = [ Wlv | Wmu ] (one-time, tiny).
    w1_c = w1.astype(cdt)
    wh_c = jnp.concatenate([wlv, wmu], axis=1).astype(cdt)
    b1_c = jnp.reshape(b1, (1, -1)).astype(f32)
    bh_c = jnp.concatenate([jnp.reshape(blv, (1, -1)),
                            jnp.reshape(bmu, (1, -1))], axis=1).astype(f32)
    if Hp != H:
        # Zero-pad only along the tiled hidden dim so ragged chunks contribute
        # exactly zero (relu(0 + 0) @ 0 == 0); outputs stay bit-exact.
        w1_c = jnp.pad(w1_c, ((0, 0), (0, Hp - H)))
        b1_c = jnp.pad(b1_c, ((0, 0), (0, Hp - H)))
        wh_c = jnp.pad(wh_c, ((0, Hp - H), (0, 0)))

    nb = pl.cdiv(B, tile_b)
    grid = (nb, nh)

    cost = pl.CostEstimate(
        flops=2 * B * F * Hp + 2 * B * Hp * (2 * Z) + 8 * B * Z + B * Hp,
        transcendentals=B * Z,
        bytes_accessed=(B * F + F * Hp + Hp * 2 * Z + B * Z) * cdt.itemsize
                       + (Hp + 2 * Z + 3 * B * Z) * 4,
    )

    def _bs(shape, index_map, mode=None):
        if mode is None:
            return pl.BlockSpec(shape, index_map)
        return pl.BlockSpec(shape, index_map, pipeline_mode=mode)

    def _run(use_single_buffer):
        res = pl.Buffered(1) if use_single_buffer else None
        # Weights streamed over hidden chunks must keep default multi-buffering.
        w_mode = res if nh == 1 else None
        in_specs = [
            _bs((tile_b, F), lambda i, k: (i, 0)),                 # x tile
            _bs((F, tile_h), lambda i, k: (0, k), w_mode),         # W1 chunk
            _bs((1, tile_h), lambda i, k: (0, k), w_mode),         # b1 chunk
            _bs((tile_h, 2 * Z), lambda i, k: (k, 0), w_mode),     # Wlv|Wmu chunk
            _bs((1, 2 * Z), lambda i, k: (0, 0), res),             # blv|bmu
            _bs((tile_b, Z), lambda i, k: (i, 0)),                 # eps tile
        ]
        out_specs = (
            _bs((tile_b, 2 * Z), lambda i, k: (i, 0)),             # fused heads
            _bs((tile_b, Z), lambda i, k: (i, 0)),                 # z
        )
        return pl.pallas_call(
            _vmlp_kernel,
            out_shape=(jax.ShapeDtypeStruct((B, 2 * Z), f32),
                       jax.ShapeDtypeStruct((B, Z), f32)),
            grid_spec=pltpu.PrefetchScalarGridSpec(
                num_scalar_prefetch=0,
                grid=grid,
                in_specs=in_specs,
                out_specs=out_specs,
            ),
            compiler_params=pltpu.CompilerParams(
                dimension_semantics=("parallel", "arbitrary"),
                vmem_limit_bytes=int(vmem_budget),
            ),
            cost_estimate=cost,
        )(x_c, w1_c, b1_c, wh_c, bh_c, eps_c)

    if single_buffer:
        try:
            heads, z = _run(True)
        except Exception:
            # Older jax without Buffered(1) support: default double-buffering.
            heads, z = _run(False)
    else:
        heads, z = _run(False)

    logvar = heads[:, :Z]
    mu = heads[:, Z:]
    return z, logvar, mu


def init_params(key, in_features, hidden_dim, z_dim):
    """Deterministic init mimicking torch.nn.Linear (uniform +/- 1/sqrt(fan_in)).
    Weights are stored as [in, out] (transposed vs. PyTorch's [out, in])."""
    ks = jax.random.split(key, 6)

    def lin(kw, kb, fan_in, fan_out):
        bound = 1.0 / jnp.sqrt(jnp.float32(fan_in))
        w = jax.random.uniform(kw, (fan_in, fan_out), jnp.float32, -bound, bound)
        b = jax.random.uniform(kb, (1, fan_out), jnp.float32, -bound, bound)
        return w, b

    w1, b1 = lin(ks[0], ks[1], in_features, hidden_dim)
    wlv, blv = lin(ks[2], ks[3], hidden_dim, z_dim)
    wmu, bmu = lin(ks[4], ks[5], hidden_dim, z_dim)
    return w1, b1, wlv, blv, wmu, bmu


def _reference(x, w1, b1, wlv, blv, wmu, bmu, eps):
    h = jnp.maximum(x @ w1 + b1, 0.0)
    logvar = h @ wlv + blv
    mu = h @ wmu + bmu
    z = jnp.exp(0.5 * logvar) * eps + mu
    return z, logvar, mu


if __name__ == "__main__":
    batch, in_features, hidden_dim, z_dim = 8, 16, 32, 8

    key = jax.random.PRNGKey(0)
    k_x, k_eps, k_p1, k_p2 = jax.random.split(key, 4)

    x = jax.random.normal(k_x, (batch, in_features), jnp.float32)
    eps = jax.random.normal(k_eps, (batch, z_dim), jnp.float32)  # randn_like(mu)
    params = init_params(k_p1, in_features, hidden_dim, z_dim)
    z_ref, lv_ref, mu_ref = _reference(x, *params, eps)

    # --- f32 path: exact check (fully resident weights, nh == 1) -------------
    z, lv, mu = variational_mlp(x, *params, eps, compute_dtype=jnp.float32)
    jax.block_until_ready((z, lv, mu))
    assert z.shape == (batch, z_dim) and lv.shape == (batch, z_dim)
    assert jnp.allclose(z, z_ref, atol=1e-5), "z mismatch (f32)"
    assert jnp.allclose(lv, lv_ref, atol=1e-5), "logvar mismatch (f32)"
    assert jnp.allclose(mu, mu_ref, atol=1e-5), "mu mismatch (f32)"

    # --- default bf16-MXU path (f32 accumulate + f32 elementwise tail) -------
    z16, lv16, mu16 = variational_mlp(x, *params, eps)
    jax.block_until_ready((z16, lv16, mu16))
    assert jnp.allclose(z16, z_ref, atol=1e-1, rtol=1e-1), "z mismatch (bf16)"
    assert jnp.allclose(lv16, lv_ref, atol=1e-1, rtol=1e-1), "logvar mismatch (bf16)"
    assert jnp.allclose(mu16, mu_ref, atol=1e-1, rtol=1e-1), "mu mismatch (bf16)"

    # --- forced hidden-dim (K) tiling path: H=256 split into 128-wide chunks -
    hidden_big = 256
    params_big = init_params(k_p2, in_features, hidden_big, z_dim)
    z_ref2, lv_ref2, mu_ref2 = _reference(x, *params_big, eps)
    z2, lv2, mu2 = variational_mlp(x, *params_big, eps,
                                   compute_dtype=jnp.float32, tile_h=128)
    jax.block_until_ready((z2, lv2, mu2))
    assert jnp.allclose(z2, z_ref2, atol=1e-4, rtol=1e-4), "z mismatch (K-tiled)"
    assert jnp.allclose(lv2, lv_ref2, atol=1e-4, rtol=1e-4), "logvar mismatch (K-tiled)"
    assert jnp.allclose(mu2, mu_ref2, atol=1e-4, rtol=1e-4), "mu mismatch (K-tiled)"

    print("KERNEL_OK")
</pallas_src>

<mosaic_0001>
module attributes {stable_mosaic.version = 11 : i64} {
  func.func @_vmlp_kernel(%arg0: i32, %arg1: i32, %arg2: memref<8x16xf32, #tpu.memory_space<vmem>>, %arg3: memref<16x32xf32, #tpu.memory_space<vmem>>, %arg4: memref<1x32xf32, #tpu.memory_space<vmem>>, %arg5: memref<32x16xf32, #tpu.memory_space<vmem>>, %arg6: memref<1x16xf32, #tpu.memory_space<vmem>>, %arg7: memref<8x8xf32, #tpu.memory_space<vmem>>, %arg8: memref<8x16xf32, #tpu.memory_space<vmem>>, %arg9: memref<8x8xf32, #tpu.memory_space<vmem>>) attributes {dimension_semantics = [#tpu.dimension_semantics<parallel>, #tpu.dimension_semantics<arbitrary>], iteration_bounds = array<i64: 1, 1>, scalar_prefetch = 0 : i64, scratch_operands = 0 : i64, tpu.core_type = #tpu.core_type<tc>, window_params = [{transform_indices = @transform_0, window_bounds = array<i64: 8, 16>}, {pipeline_mode = #tpu.pipeline_mode<synchronous>, transform_indices = @transform_1, window_bounds = array<i64: 16, 32>}, {pipeline_mode = #tpu.pipeline_mode<synchronous>, transform_indices = @transform_2, window_bounds = array<i64: 1, 32>}, {pipeline_mode = #tpu.pipeline_mode<synchronous>, transform_indices = @transform_3, window_bounds = array<i64: 32, 16>}, {pipeline_mode = #tpu.pipeline_mode<synchronous>, transform_indices = @transform_4, window_bounds = array<i64: 1, 16>}, {transform_indices = @transform_5, window_bounds = array<i64: 8, 8>}, {transform_indices = @transform_6, window_bounds = array<i64: 8, 16>}, {transform_indices = @transform_7, window_bounds = array<i64: 8, 8>}]} {
    %c0_i32 = arith.constant 0 : i32
    %0 = arith.cmpi eq, %arg1, %c0_i32 : i32
    %1 = arith.extui %0 : i1 to i32
    %c0_i32_0 = arith.constant 0 : i32
    %2 = arith.cmpi ne, %1, %c0_i32_0 : i32
    scf.if %2 {
      %cst_16 = arith.constant 0.000000e+00 : f32
      %19 = vector.broadcast %cst_16 : f32 to vector<8x16xf32>
      %c0_17 = arith.constant 0 : index
      %c0_18 = arith.constant 0 : index
      %20 = vector.load %arg8[%c0_17, %c0_18] : memref<8x16xf32, #tpu.memory_space<vmem>>, vector<8x16xf32>
      tpu.vector_store %arg8[%c0_17, %c0_18], %19 {strides = array<i32>} : memref<8x16xf32, #tpu.memory_space<vmem>>, vector<8x16xf32>,
    } else {
    }
    %c0 = arith.constant 0 : index
    %c0_1 = arith.constant 0 : index
    %3 = vector.load %arg2[%c0, %c0_1] : memref<8x16xf32, #tpu.memory_space<vmem>>, vector<8x16xf32>
    %c0_2 = arith.constant 0 : index
    %c0_3 = arith.constant 0 : index
    %4 = vector.load %arg3[%c0_2, %c0_3] : memref<16x32xf32, #tpu.memory_space<vmem>>, vector<16x32xf32>
    %cst = arith.constant dense<0.000000e+00> : vector<8x32xf32>
    %5 = tpu.matmul %3, %4, %cst {dimension_numbers = #tpu.dot_dimension_numbers<[1], [0], [0], [1], [0, 0, 1, 1], [], []>} : vector<8x16xf32>, vector<16x32xf32>, vector<8x32xf32> -> vector<8x32xf32>
    %c0_4 = arith.constant 0 : index
    %c0_5 = arith.constant 0 : index
    %6 = vector.load %arg4[%c0_4, %c0_5] : memref<1x32xf32, #tpu.memory_space<vmem>>, vector<1x32xf32>
    %7 = vector.broadcast %6 : vector<1x32xf32> to vector<8x32xf32>
    %8 = arith.addf %5, %7 : vector<8x32xf32>
    %cst_6 = arith.constant 0.000000e+00 : f32
    %9 = vector.broadcast %cst_6 : f32 to vector<8x32xf32>
    %10 = arith.maximumf %8, %9 : vector<8x32xf32>
    %c0_7 = arith.constant 0 : index
    %c0_8 = arith.constant 0 : index
    %11 = vector.load %arg8[%c0_7, %c0_8] : memref<8x16xf32, #tpu.memory_space<vmem>>, vector<8x16xf32>
    %c0_9 = arith.constant 0 : index
    %c0_10 = arith.constant 0 : index
    %12 = vector.load %arg5[%c0_9, %c0_10] : memref<32x16xf32, #tpu.memory_space<vmem>>, vector<32x16xf32>
    %cst_11 = arith.constant dense<0.000000e+00> : vector<8x16xf32>
    %13 = tpu.matmul %10, %12, %cst_11 {dimension_numbers = #tpu.dot_dimension_numbers<[1], [0], [0], [1], [0, 0, 1, 1], [], []>} : vector<8x32xf32>, vector<32x16xf32>, vector<8x16xf32> -> vector<8x16xf32>
    %14 = arith.addf %11, %13 : vector<8x16xf32>
    %c0_12 = arith.constant 0 : index
    %c0_13 = arith.constant 0 : index
    %15 = vector.load %arg8[%c0_12, %c0_13] : memref<8x16xf32, #tpu.memory_space<vmem>>, vector<8x16xf32>
    tpu.vector_store %arg8[%c0_12, %c0_13], %14 {strides = array<i32>} : memref<8x16xf32, #tpu.memory_space<vmem>>, vector<8x16xf32>,
    %c0_i32_14 = arith.constant 0 : i32
    %16 = arith.cmpi eq, %arg1, %c0_i32_14 : i32
    %17 = arith.extui %16 : i1 to i32
    %c0_i32_15 = arith.constant 0 : i32
    %18 = arith.cmpi ne, %17, %c0_i32_15 : i32
    scf.if %18 {
      %c0_16 = arith.constant 0 : index
      %c0_17 = arith.constant 0 : index
      %19 = vector.load %arg8[%c0_16, %c0_17] : memref<8x16xf32, #tpu.memory_space<vmem>>, vector<8x16xf32>
      %c0_18 = arith.constant 0 : index
      %c0_19 = arith.constant 0 : index
      %20 = vector.load %arg6[%c0_18, %c0_19] : memref<1x16xf32, #tpu.memory_space<vmem>>, vector<1x16xf32>
      %21 = vector.broadcast %20 : vector<1x16xf32> to vector<8x16xf32>
      %22 = arith.addf %19, %21 : vector<8x16xf32>
      %c0_20 = arith.constant 0 : index
      %c0_21 = arith.constant 0 : index
      %23 = vector.load %arg8[%c0_20, %c0_21] : memref<8x16xf32, #tpu.memory_space<vmem>>, vector<8x16xf32>
      tpu.vector_store %arg8[%c0_20, %c0_21], %22 {strides = array<i32>} : memref<8x16xf32, #tpu.memory_space<vmem>>, vector<8x16xf32>,
      %24 = vector.extract_strided_slice %22 {offsets = [0, 0], sizes = [8, 8], strides = [1, 1]} : vector<8x16xf32> to vector<8x8xf32>
      %25 = vector.extract_strided_slice %22 {offsets = [0, 8], sizes = [8, 8], strides = [1, 1]} : vector<8x16xf32> to vector<8x8xf32>
      %cst_22 = arith.constant 5.000000e-01 : f32
      %26 = vector.broadcast %cst_22 : f32 to vector<8x8xf32>
      %27 = arith.mulf %26, %24 : vector<8x8xf32>
      %28 = math.exp %27 : vector<8x8xf32>
      %c0_23 = arith.constant 0 : index
      %c0_24 = arith.constant 0 : index
      %29 = vector.load %arg7[%c0_23, %c0_24] : memref<8x8xf32, #tpu.memory_space<vmem>>, vector<8x8xf32>
      %30 = arith.mulf %28, %29 : vector<8x8xf32>
      %31 = arith.addf %30, %25 : vector<8x8xf32>
      %c0_25 = arith.constant 0 : index
      %c0_26 = arith.constant 0 : index
      %32 = vector.load %arg9[%c0_25, %c0_26] : memref<8x8xf32, #tpu.memory_space<vmem>>, vector<8x8xf32>
      tpu.vector_store %arg9[%c0_25, %c0_26], %31 {strides = array<i32>} : memref<8x8xf32, #tpu.memory_space<vmem>>, vector<8x8xf32>,
    } else {
    }
    return
  }
  func.func @transform_0(%arg0: i32, %arg1: i32) -> (i32, i32) {
    %c0_i32 = arith.constant 0 : i32
    %c0_i32_0 = arith.constant 0 : i32
    return %arg0, %c0_i32 : i32, i32
  }
  func.func @transform_1(%arg0: i32, %arg1: i32) -> (i32, i32) {
    %c0_i32 = arith.constant 0 : i32
    %c0_i32_0 = arith.constant 0 : i32
    return %c0_i32, %arg1 : i32, i32
  }
  func.func @transform_2(%arg0: i32, %arg1: i32) -> (i32, i32) {
    %c0_i32 = arith.constant 0 : i32
    %c0_i32_0 = arith.constant 0 : i32
    return %c0_i32, %arg1 : i32, i32
  }
  func.func @transform_3(%arg0: i32, %arg1: i32) -> (i32, i32) {
    %c0_i32 = arith.constant 0 : i32
    %c0_i32_0 = arith.constant 0 : i32
    return %arg1, %c0_i32 : i32, i32
  }
  func.func @transform_4(%arg0: i32, %arg1: i32) -> (i32, i32) {
    %c0_i32 = arith.constant 0 : i32
    %c0_i32_0 = arith.constant 0 : i32
    %c0_i32_1 = arith.constant 0 : i32
    return %c0_i32, %c0_i32_0 : i32, i32
  }
  func.func @transform_5(%arg0: i32, %arg1: i32) -> (i32, i32) {
    %c0_i32 = arith.constant 0 : i32
    %c0_i32_0 = arith.constant 0 : i32
    return %arg0, %c0_i32 : i32, i32
  }
  func.func @transform_6(%arg0: i32, %arg1: i32) -> (i32, i32) {
    %c0_i32 = arith.constant 0 : i32
    %c0_i32_0 = arith.constant 0 : i32
    return %arg0, %c0_i32 : i32, i32
  }
  func.func @transform_7(%arg0: i32, %arg1: i32) -> (i32, i32) {
    %c0_i32 = arith.constant 0 : i32
    %c0_i32_0 = arith.constant 0 : i32
    return %arg0, %c0_i32 : i32, i32
  }
}

module attributes {stable_mosaic.version = 11 : i64} {
  func.func @_vmlp_kernel(%arg0: i32, %arg1: i32, %arg2: memref<8x16xf32, #tpu.memory_space<vmem>>, %arg3: memref<16x32xf32, #tpu.memory_space<vmem>>, %arg4: memref<1x32xf32, #tpu.memory_space<vmem>>, %arg5: memref<32x16xf32, #tpu.memory_space<vmem>>, %arg6: memref<1x16xf32, #tpu.memory_space<vmem>>, %arg7: memref<8x8xf32, #tpu.memory_space<vmem>>, %arg8: memref<8x16xf32, #tpu.memory_space<vmem>>, %arg9: memref<8x8xf32, #tpu.memory_space<vmem>>) attributes {dimension_semantics = [#tpu.dimension_semantics<parallel>, #tpu.dimension_semantics<arbitrary>], iteration_bounds = array<i64: 1, 1>, scalar_prefetch = 0 : i64, scratch_operands = 0 : i64, tpu.core_type = #tpu.core_type<tc>, window_params = [{transform_indices = @transform_0, window_bounds = array<i64: 8, 16>}, {transform_indices = @transform_1, window_bounds = array<i64: 16, 32>}, {transform_indices = @transform_2, window_bounds = array<i64: 1, 32>}, {transform_indices = @transform_3, window_bounds = array<i64: 32, 16>}, {pipeline_mode = #tpu.pipeline_mode<synchronous>, transform_indices = @transform_4, window_bounds = array<i64: 1, 16>}, {transform_indices = @transform_5, window_bounds = array<i64: 8, 8>}, {transform_indices = @transform_6, window_bounds = array<i64: 8, 16>}, {transform_indices = @transform_7, window_bounds = array<i64: 8, 8>}]} {
    %c0_i32 = arith.constant 0 : i32
    %0 = arith.cmpi eq, %arg1, %c0_i32 : i32
    %1 = arith.extui %0 : i1 to i32
    %c0_i32_0 = arith.constant 0 : i32
    %2 = arith.cmpi ne, %1, %c0_i32_0 : i32
    scf.if %2 {
      %cst_16 = arith.constant 0.000000e+00 : f32
      %19 = vector.broadcast %cst_16 : f32 to vector<8x16xf32>
      %c0_17 = arith.constant 0 : index
      %c0_18 = arith.constant 0 : index
      %20 = vector.load %arg8[%c0_17, %c0_18] : memref<8x16xf32, #tpu.memory_space<vmem>>, vector<8x16xf32>
      tpu.vector_store %arg8[%c0_17, %c0_18], %19 {strides = array<i32>} : memref<8x16xf32, #tpu.memory_space<vmem>>, vector<8x16xf32>,
    } else {
    }
    %c0 = arith.constant 0 : index
    %c0_1 = arith.constant 0 : index
    %3 = vector.load %arg2[%c0, %c0_1] : memref<8x16xf32, #tpu.memory_space<vmem>>, vector<8x16xf32>
    %c0_2 = arith.constant 0 : index
    %c0_3 = arith.constant 0 : index
    %4 = vector.load %arg3[%c0_2, %c0_3] : memref<16x32xf32, #tpu.memory_space<vmem>>, vector<16x32xf32>
    %cst = arith.constant dense<0.000000e+00> : vector<8x32xf32>
    %5 = tpu.matmul %3, %4, %cst {dimension_numbers = #tpu.dot_dimension_numbers<[1], [0], [0], [1], [0, 0, 1, 1], [], []>} : vector<8x16xf32>, vector<16x32xf32>, vector<8x32xf32> -> vector<8x32xf32>
    %c0_4 = arith.constant 0 : index
    %c0_5 = arith.constant 0 : index
    %6 = vector.load %arg4[%c0_4, %c0_5] : memref<1x32xf32, #tpu.memory_space<vmem>>, vector<1x32xf32>
    %7 = vector.broadcast %6 : vector<1x32xf32> to vector<8x32xf32>
    %8 = arith.addf %5, %7 : vector<8x32xf32>
    %cst_6 = arith.constant 0.000000e+00 : f32
    %9 = vector.broadcast %cst_6 : f32 to vector<8x32xf32>
    %10 = arith.maximumf %8, %9 : vector<8x32xf32>
    %c0_7 = arith.constant 0 : index
    %c0_8 = arith.constant 0 : index
    %11 = vector.load %arg8[%c0_7, %c0_8] : memref<8x16xf32, #tpu.memory_space<vmem>>, vector<8x16xf32>
    %c0_9 = arith.constant 0 : index
    %c0_10 = arith.constant 0 : index
    %12 = vector.load %arg5[%c0_9, %c0_10] : memref<32x16xf32, #tpu.memory_space<vmem>>, vector<32x16xf32>
    %cst_11 = arith.constant dense<0.000000e+00> : vector<8x16xf32>
    %13 = tpu.matmul %10, %12, %cst_11 {dimension_numbers = #tpu.dot_dimension_numbers<[1], [0], [0], [1], [0, 0, 1, 1], [], []>} : vector<8x32xf32>, vector<32x16xf32>, vector<8x16xf32> -> vector<8x16xf32>
    %14 = arith.addf %11, %13 : vector<8x16xf32>
    %c0_12 = arith.constant 0 : index
    %c0_13 = arith.constant 0 : index
    %15 = vector.load %arg8[%c0_12, %c0_13] : memref<8x16xf32, #tpu.memory_space<vmem>>, vector<8x16xf32>
    tpu.vector_store %arg8[%c0_12, %c0_13], %14 {strides = array<i32>} : memref<8x16xf32, #tpu.memory_space<vmem>>, vector<8x16xf32>,
    %c0_i32_14 = arith.constant 0 : i32
    %16 = arith.cmpi eq, %arg1, %c0_i32_14 : i32
    %17 = arith.extui %16 : i1 to i32
    %c0_i32_15 = arith.constant 0 : i32
    %18 = arith.cmpi ne, %17, %c0_i32_15 : i32
    scf.if %18 {
      %c0_16 = arith.constant 0 : index
      %c0_17 = arith.constant 0 : index
      %19 = vector.load %arg8[%c0_16, %c0_17] : memref<8x16xf32, #tpu.memory_space<vmem>>, vector<8x16xf32>
      %c0_18 = arith.constant 0 : index
      %c0_19 = arith.constant 0 : index
      %20 = vector.load %arg6[%c0_18, %c0_19] : memref<1x16xf32, #tpu.memory_space<vmem>>, vector<1x16xf32>
      %21 = vector.broadcast %20 : vector<1x16xf32> to vector<8x16xf32>
      %22 = arith.addf %19, %21 : vector<8x16xf32>
      %c0_20 = arith.constant 0 : index
      %c0_21 = arith.constant 0 : index
      %23 = vector.load %arg8[%c0_20, %c0_21] : memref<8x16xf32, #tpu.memory_space<vmem>>, vector<8x16xf32>
      tpu.vector_store %arg8[%c0_20, %c0_21], %22 {strides = array<i32>} : memref<8x16xf32, #tpu.memory_space<vmem>>, vector<8x16xf32>,
      %24 = vector.extract_strided_slice %22 {offsets = [0, 0], sizes = [8, 8], strides = [1, 1]} : vector<8x16xf32> to vector<8x8xf32>
      %25 = vector.extract_strided_slice %22 {offsets = [0, 8], sizes = [8, 8], strides = [1, 1]} : vector<8x16xf32> to vector<8x8xf32>
      %cst_22 = arith.constant 5.000000e-01 : f32
      %26 = vector.broadcast %cst_22 : f32 to vector<8x8xf32>
      %27 = arith.mulf %26, %24 : vector<8x8xf32>
      %28 = math.exp %27 : vector<8x8xf32>
      %c0_23 = arith.constant 0 : index
      %c0_24 = arith.constant 0 : index
      %29 = vector.load %arg7[%c0_23, %c0_24] : memref<8x8xf32, #tpu.memory_space<vmem>>, vector<8x8xf32>
      %30 = arith.mulf %28, %29 : vector<8x8xf32>
      %31 = arith.addf %30, %25 : vector<8x8xf32>
      %c0_25 = arith.constant 0 : index
      %c0_26 = arith.constant 0 : index
      %32 = vector.load %arg9[%c0_25, %c0_26] : memref<8x8xf32, #tpu.memory_space<vmem>>, vector<8x8xf32>
      tpu.vector_store %arg9[%c0_25, %c0_26], %31 {strides = array<i32>} : memref<8x8xf32, #tpu.memory_space<vmem>>, vector<8x8xf32>,
    } else {
    }
    return
  }
  func.func @transform_0(%arg0: i32, %arg1: i32) -> (i32, i32) {
    %c0_i32 = arith.constant 0 : i32
    %c0_i32_0 = arith.constant 0 : i32
    return %arg0, %c0_i32 : i32, i32
  }
  func.func @transform_1(%arg0: i32, %arg1: i32) -> (i32, i32) {
    %c0_i32 = arith.constant 0 : i32
    %c0_i32_0 = arith.constant 0 : i32
    return %c0_i32, %arg1 : i32, i32
  }
  func.func @transform_2(%arg0: i32, %arg1: i32) -> (i32, i32) {
    %c0_i32 = arith.constant 0 : i32
    %c0_i32_0 = arith.constant 0 : i32
    return %c0_i32, %arg1 : i32, i32
  }
  func.func @transform_3(%arg0: i32, %arg1: i32) -> (i32, i32) {
    %c0_i32 = arith.constant 0 : i32
    %c0_i32_0 = arith.constant 0 : i32
    return %arg1, %c0_i32 : i32, i32
  }
  func.func @transform_4(%arg0: i32, %arg1: i32) -> (i32, i32) {
    %c0_i32 = arith.constant 0 : i32
    %c0_i32_0 = arith.constant 0 : i32
    %c0_i32_1 = arith.constant 0 : i32
    return %c0_i32, %c0_i32_0 : i32, i32
  }
  func.func @transform_5(%arg0: i32, %arg1: i32) -> (i32, i32) {
    %c0_i32 = arith.constant 0 : i32
    %c0_i32_0 = arith.constant 0 : i32
    return %arg0, %c0_i32 : i32, i32
  }
  func.func @transform_6(%arg0: i32, %arg1: i32) -> (i32, i32) {
    %c0_i32 = arith.constant 0 : i32
    %c0_i32_0 = arith.constant 0 : i32
    return %arg0, %c0_i32 : i32, i32
  }
  func.func @transform_7(%arg0: i32, %arg1: i32) -> (i32, i32) {
    %c0_i32 = arith.constant 0 : i32
    %c0_i32_0 = arith.constant 0 : i32
    return %arg0, %c0_i32 : i32, i32
  }
}

</mosaic_0001>

<llo_original>
// kernel: tpu_custom_call.1
$region0: #{tpu_custom_call.1}
  #allocation0 [shape = 'u32[]', space=smem, size = 0x4, offset = 0x4, fixed_abs, tag = 'smem constant byte address 0x4 - core index']
  #allocation1 [shape = 'u32[144,128]{1,0:T(1,128)}', space=vmem, size = 0x12000, scoped, tag = 'internal scratch']
  %s0 = inlined_call_operand.vmem [shape: f32[8,16], index: 0, kind: input, shape index: {}]
  %s1 = inlined_call_operand.vmem [shape: f32[16,32], index: 1, kind: input, shape index: {}]
  %s2 = inlined_call_operand.vmem [shape: f32[1,32], index: 2, kind: input, shape index: {}]
  %s3 = inlined_call_operand.vmem [shape: f32[32,16], index: 3, kind: input, shape index: {}]
  %s4 = inlined_call_operand.vmem [shape: f32[1,16], index: 4, kind: input, shape index: {}]
  %s5 = inlined_call_operand.vmem [shape: f32[8,8], index: 5, kind: input, shape index: {}]
  %s6 = inlined_call_operand.hbm [shape: f32[8,16], index: 6, kind: output, shape index: {0}]
  %s7 = inlined_call_operand.hbm [shape: f32[8,8], index: 7, kind: output, shape index: {1}]
  %8 = xla_tuple %s6, %s7
  %s9 = sld [smem:[#allocation0]]
  $region50: #{tpu_custom_call.1} parent=0
    _
  %s11 = ssub.s32 1, %s9
  %s12 = scalar_select 0, %s11, %s9
  $region1: #{tpu_custom_call.1} parent=0
    #allocation2 [shape = 'u8[4096]{0}', space=vmem, size = 0x1000, scoped, tag = 'output window, operand 0, single buffered']
    #allocation3 [shape = 's32[1]{0}', space=sflag, size = 0x4, scoped, tag = 'scoped memory for tpu_custom_call.1']
    #allocation4 [shape = 'u8[4096]{0}', space=vmem, size = 0x1000, scoped, tag = 'output window, operand 1, single buffered']
    #allocation5 [shape = 's32[1]{0}', space=sflag, size = 0x4, scoped, tag = 'scoped memory for tpu_custom_call.1']
    %13 = vsyncpa [#allocation3], 0
    %14 = vsyncpa [#allocation5], 0
    // Predicated region
    $region2: #{tpu_custom_call.1} parent=1 // pred_check
      _
    $region3: #{tpu_custom_call.1} parent=1 // pred_check_branch
      %16 = sbr.rel (0) target = $region5
    $region4: #{tpu_custom_call.1} parent=1 // pred_region
      _
    $region5: #{tpu_custom_call.1} parent=1 // pred_fallthru
      _
    // Predicated region
    $region6: #{tpu_custom_call.1} parent=1 // pred_check
      _
    $region7: #{tpu_custom_call.1} parent=1 // pred_check_branch
      %18 = sbr.rel (0) target = $region9
    $region8: #{tpu_custom_call.1} parent=1 // pred_region
      _
    $region9: #{tpu_custom_call.1} parent=1 // pred_fallthru
      _
    // Predicated region
    $region10: #{tpu_custom_call.1} parent=1 // pred_check
      _
    $region11: #{tpu_custom_call.1} parent=1 // pred_check_branch
      %20 = sbr.rel (0) target = $region13
    $region12: #{tpu_custom_call.1} parent=1 // pred_region
      _
    $region13: #{tpu_custom_call.1} parent=1 // pred_fallthru
      _
    // Predicated region
    $region14: #{tpu_custom_call.1} parent=1 // pred_check
      _
    $region15: #{tpu_custom_call.1} parent=1 // pred_check_branch
      %22 = sbr.rel (0) target = $region17
    $region16: #{tpu_custom_call.1} parent=1 // pred_region
      _
    $region17: #{tpu_custom_call.1} parent=1 // pred_fallthru
      _
    // Predicated region
    $region18: #{tpu_custom_call.1} parent=1 // pred_check
      _
    $region19: #{tpu_custom_call.1} parent=1 // pred_check_branch
      %24 = sbr.rel (0) target = $region21
    $region20: #{tpu_custom_call.1} parent=1 // pred_region
      _
    $region21: #{tpu_custom_call.1} parent=1 // pred_fallthru
      _
    // Predicated region
    $region22: #{tpu_custom_call.1} parent=1 // pred_check
      _
    $region23: #{tpu_custom_call.1} parent=1 // pred_check_branch
      %26 = sbr.rel (0) target = $region25
    $region24: #{tpu_custom_call.1} parent=1 // pred_region
      _
    $region25: #{tpu_custom_call.1} parent=1 // pred_fallthru
      _
    %p27 = scmp.eq.s32.totalorder 0, 0
    // Predicated region
    $region26: #{tpu_custom_call.1} parent=1 // pred_check
      %p28 = pneg %p27
    $region27: #{tpu_custom_call.1} parent=1 // pred_check_branch
      %30 = sbr.rel (%p28) target = $region29
    $region28: #{tpu_custom_call.1} parent=1 // pred_region
      %vm31 = vcmask 130048
      %32 = vst.msk [vmem:[#allocation2] sm:$0xff] %vm31, 0.0
    $region29: #{tpu_custom_call.1} parent=1 // pred_fallthru
      _
    %v33 = vld [vmem:[%s0] sm:$0xff]
    %v34 = vld [vmem:[%s1] sm:$0xff]
    %v35 = vld [vmem:[%s1 + $0x8] sm:$0xff]
    %v36 = vld [vmem:[%s2] sm:$0x1]
    %v38 = vlaneseq
    %v39 = vshrl.u32 %v38, 7
    %v40 = vsub.s32 0, %v39
    %v41 = vrot.slane %v36, %v40
    %vm43 = vcmask 130048
    %v45 = vsel %vm43, %v33, 0
    %47 = vmatprep.subr.mxu0 0.0
    %48 = vmatpush1.msra.mxu0 %v34
    %49 = vmatprep.subr.mxu0 0.0
    %50 = vmatpush1.msra.mxu0 %v35
    %51 = vmatprep.subr.mxu0 0.0
    %52 = vmatpush1.msra.mxu0 0.0
    %53 = vmatprep.subr.mxu0 0.0
    %54 = vmatpush1.msra.mxu0 0.0
    %55 = vmatprep.subr.mxu0 0.0
    %56 = vmatpush1.msra.mxu0 0.0
    %57 = vmatprep.subr.mxu0 0.0
    %58 = vmatpush1.msra.mxu0 0.0
    %59 = vmatprep.subr.mxu0 0.0
    %60 = vmatpush1.msra.mxu0 0.0
    %61 = vmatprep.subr.mxu0 0.0
    %62 = vmatpush1.msra.mxu0 0.0
    %63 = vmatprep.subr.mxu0 0.0
    %64 = vmatpush1.msra.mxu0 0.0
    %65 = vmatprep.subr.mxu0 0.0
    %66 = vmatpush1.msra.mxu0 0.0
    %67 = vmatprep.subr.mxu0 0.0
    %68 = vmatpush1.msra.mxu0 0.0
    %69 = vmatprep.subr.mxu0 0.0
    %70 = vmatpush1.msra.mxu0 0.0
    %71 = vmatprep.subr.mxu0 0.0
    %72 = vmatpush1.msra.mxu0 0.0
    %73 = vmatprep.subr.mxu0 0.0
    %74 = vmatpush1.msra.mxu0 0.0
    %75 = vmatprep.subr.mxu0 0.0
    %76 = vmatpush1.msra.mxu0 0.0
    %77 = vmatprep.subr.mxu0 0.0
    %78 = vmatpush1.msra.mxu0 0.0
    %79 = vmatprep.subr.mxu0 0.0
    %80 = vmatpush1.msra.mxu0 0.0
    %81 = vmatprep.subr.mxu0 0.0
    %82 = vmatpush1.msra.mxu0 0.0
    %83 = vmatprep.subr.mxu0 0.0
    %84 = vmatpush1.msra.mxu0 0.0
    %85 = vmatprep.subr.mxu0 0.0
    %86 = vmatpush1.msra.mxu0 0.0
    %87 = vmatprep.subr.mxu0 0.0
    %88 = vmatpush1.msra.mxu0 0.0
    %89 = vmatprep.subr.mxu0 0.0
    %90 = vmatpush1.msra.mxu0 0.0
    %91 = vmatprep.subr.mxu0 0.0
    %92 = vmatpush1.msra.mxu0 0.0
    %93 = vmatprep.subr.mxu0 0.0
    %94 = vmatpush1.msra.mxu0 0.0
    %95 = vmatprep.subr.mxu0 0.0
    %96 = vmatpush1.msra.mxu0 0.0
    %97 = vmatprep.subr.mxu0 0.0
    %98 = vmatpush1.msra.mxu0 0.0
    %99 = vmatprep.subr.mxu0 0.0
    %100 = vmatpush1.msra.mxu0 0.0
    %101 = vmatprep.subr.mxu0 0.0
    %102 = vmatpush1.msra.mxu0 0.0
    %103 = vmatprep.subr.mxu0 0.0
    %104 = vmatpush1.msra.mxu0 0.0
    %105 = vmatprep.subr.mxu0 0.0
    %106 = vmatpush1.msra.mxu0 0.0
    %107 = vmatprep.subr.mxu0 0.0
    %108 = vmatpush1.msra.mxu0 0.0
    %109 = vmatprep.subr.mxu0 0.0
    %110 = vmatpush1.msra.mxu0 0.0
    %111 = vmatprep.mubr.f32.mxu0 0.0
    %112 = vmatmul.mubr.f32.gmra.mrb[0].mxu0 %v45
    %v113 = vpop.f32.mrb[0].mxu0
    %v114 = vadd.f32 %v41, %v113
    %v115 = vpop.f32.mrb[0].mxu0
    %116 = vdwg.mxu0
    %v117 = vmax.f32 %v114, 0.0
    %v118 = vld [vmem:[#allocation2] sm:$0xff]
    %v119 = vld [vmem:[%s3] sm:$0xff]
    %v120 = vld [vmem:[%s3 + $0x8] sm:$0xff]
    %v121 = vld [vmem:[%s3 + $0x10] sm:$0xff]
    %v122 = vld [vmem:[%s3 + $0x18] sm:$0xff]
    %vm123 = vcmask 261120
    %v125 = vsel %vm123, %v117, 0
    %127 = vmatprep.subr.mxu0 0.0
    %128 = vmatpush1.msra.mxu0 %v119
    %129 = vmatprep.subr.mxu0 0.0
    %130 = vmatpush1.msra.mxu0 %v120
    %131 = vmatprep.subr.mxu0 0.0
    %132 = vmatpush1.msra.mxu0 %v121
    %133 = vmatprep.subr.mxu0 0.0
    %134 = vmatpush1.msra.mxu0 %v122
    %135 = vmatprep.subr.mxu0 0.0
    %136 = vmatpush1.msra.mxu0 0.0
    %137 = vmatprep.subr.mxu0 0.0
    %138 = vmatpush1.msra.mxu0 0.0
    %139 = vmatprep.subr.mxu0 0.0
    %140 = vmatpush1.msra.mxu0 0.0
    %141 = vmatprep.subr.mxu0 0.0
    %142 = vmatpush1.msra.mxu0 0.0
    %143 = vmatprep.subr.mxu0 0.0
    %144 = vmatpush1.msra.mxu0 0.0
    %145 = vmatprep.subr.mxu0 0.0
    %146 = vmatpush1.msra.mxu0 0.0
    %147 = vmatprep.subr.mxu0 0.0
    %148 = vmatpush1.msra.mxu0 0.0
    %149 = vmatprep.subr.mxu0 0.0
    %150 = vmatpush1.msra.mxu0 0.0
    %151 = vmatprep.subr.mxu0 0.0
    %152 = vmatpush1.msra.mxu0 0.0
    %153 = vmatprep.subr.mxu0 0.0
    %154 = vmatpush1.msra.mxu0 0.0
    %155 = vmatprep.subr.mxu0 0.0
    %156 = vmatpush1.msra.mxu0 0.0
    %157 = vmatprep.subr.mxu0 0.0
    %158 = vmatpush1.msra.mxu0 0.0
    %159 = vmatprep.subr.mxu0 0.0
    %160 = vmatpush1.msra.mxu0 0.0
    %161 = vmatprep.subr.mxu0 0.0
    %162 = vmatpush1.msra.mxu0 0.0
    %163 = vmatprep.subr.mxu0 0.0
    %164 = vmatpush1.msra.mxu0 0.0
    %165 = vmatprep.subr.mxu0 0.0
    %166 = vmatpush1.msra.mxu0 0.0
    %167 = vmatprep.subr.mxu0 0.0
    %168 = vmatpush1.msra.mxu0 0.0
    %169 = vmatprep.subr.mxu0 0.0
    %170 = vmatpush1.msra.mxu0 0.0
    %171 = vmatprep.subr.mxu0 0.0
    %172 = vmatpush1.msra.mxu0 0.0
    %173 = vmatprep.subr.mxu0 0.0
    %174 = vmatpush1.msra.mxu0 0.0
    %175 = vmatprep.subr.mxu0 0.0
    %176 = vmatpush1.msra.mxu0 0.0
    %177 = vmatprep.subr.mxu0 0.0
    %178 = vmatpush1.msra.mxu0 0.0
    %179 = vmatprep.subr.mxu0 0.0
    %180 = vmatpush1.msra.mxu0 0.0
    %181 = vmatprep.subr.mxu0 0.0
    %182 = vmatpush1.msra.mxu0 0.0
    %183 = vmatprep.subr.mxu0 0.0
    %184 = vmatpush1.msra.mxu0 0.0
    %185 = vmatprep.subr.mxu0 0.0
    %186 = vmatpush1.msra.mxu0 0.0
    %187 = vmatprep.subr.mxu0 0.0
    %188 = vmatpush1.msra.mxu0 0.0
    %189 = vmatprep.subr.mxu0 0.0
    %190 = vmatpush1.msra.mxu0 0.0
    %191 = vmatprep.mubr.f32.mxu0 0.0
    %192 = vmatmul.mubr.f32.gmra.mrb[0].mxu0 %v125
    %v193 = vpop.f32.mrb[0].mxu0
    %v194 = vadd.f32 0.0, %v193
    %v195 = vpop.f32.mrb[0].mxu0
    %196 = vdwg.mxu0
    %v197 = vadd.f32 %v118, %v194
    %198 = vst.msk [vmem:[#allocation2] sm:$0xff] %vm43, %v197
    // Predicated region
    $region30: #{tpu_custom_call.1} parent=1 // pred_check
      %p199 = pneg %p27
    $region31: #{tpu_custom_call.1} parent=1 // pred_check_branch
      %201 = sbr.rel (%p199) target = $region33
    $region32: #{tpu_custom_call.1} parent=1 // pred_region
      %v202 = vld [vmem:[#allocation2] sm:$0xff]
      %v203 = vld [vmem:[%s4] sm:$0x1]
      %v205 = vlaneseq
      %v206 = vshrl.u32 %v205, 7
      %v207 = vsub.s32 0, %v206
      %v208 = vrot.slane %v203, %v207
      %v210 = vadd.f32 %v202, %v208
      %211 = vst.msk [vmem:[#allocation2] sm:$0xff] %vm43, %v210
      %v212 = vmul.f32 %v210, 0.5
      %v213 = vmul.f32 %v212, 1.442695
      %v214 = vpow.pop %v213
      %v215 = vld [vmem:[%s5] sm:$0xff]
      %v216 = vmul.f32 %v214, %v215
      %218 = vrot.lane.b32.xlu0 %v210, 120
      %v219 = vpop.permute.xlu0 %218
      %v221 = vadd.f32 %v216, %v219
      %vm222 = vcmask 64512
      %223 = vst.msk [vmem:[#allocation4] sm:$0xff] %vm222, %v221
    $region33: #{tpu_custom_call.1} parent=1 // pred_fallthru
      _
    // Predicated region
    $region34: #{tpu_custom_call.1} parent=1 // pred_check
      _
    $region35: #{tpu_custom_call.1} parent=1 // pred_check_branch
      %225 = sbr.rel (0) target = $region37
    $region36: #{tpu_custom_call.1} parent=1 // pred_region
      %s227 = ssub.s32 128, 128
      %228 = vsyncadd [#allocation3], %s227
      %s230 = sshll.u32 [#allocation2], 4
      %s231 = int_to_ptr.vmem [resolvable:$true] %s230
      %233 = dma.vmem_to_hbm [thread:$0]  %s231, 128, %s6, [#allocation3]
    $region37: #{tpu_custom_call.1} parent=1 // pred_fallthru
      _
    // Predicated region
    $region38: #{tpu_custom_call.1} parent=1 // pred_check
      _
    $region39: #{tpu_custom_call.1} parent=1 // pred_check_branch
      %235 = sbr.rel (0) target = $region41
    $region40: #{tpu_custom_call.1} parent=1 // pred_region
      %s237 = ssub.s32 128, 128
      %238 = vsyncadd [#allocation5], %s237
      %s240 = sshll.u32 [#allocation4], 4
      %s241 = int_to_ptr.vmem [resolvable:$true] %s240
      %243 = dma.vmem_to_hbm [thread:$0]  %s241, 128, %s7, [#allocation5]
    $region41: #{tpu_custom_call.1} parent=1 // pred_fallthru
      _
    // Predicated region
    $region42: #{tpu_custom_call.1} parent=1 // pred_check
      _
    $region43: #{tpu_custom_call.1} parent=1 // pred_check_branch
      %245 = sbr.rel (0) target = $region45
    $region44: #{tpu_custom_call.1} parent=1 // pred_region
      %246 = dma.done [#allocation3], 128
    $region45: #{tpu_custom_call.1} parent=1 // pred_fallthru
      _
    // Predicated region
    $region46: #{tpu_custom_call.1} parent=1 // pred_check
      _
    $region47: #{tpu_custom_call.1} parent=1 // pred_check_branch
      %248 = sbr.rel (0) target = $region49
    $region48: #{tpu_custom_call.1} parent=1 // pred_region
      %249 = dma.done [#allocation5], 128
    $region49: #{tpu_custom_call.1} parent=1 // pred_fallthru
      _
    %250 = vsyncpa [#allocation3], 1
    %251 = vsyncpa [#allocation5], 1

// kernel: tpu_custom_call.1
$region0: #{tpu_custom_call.1}
  #allocation0 [shape = 'u32[]', space=smem, size = 0x4, offset = 0x4, fixed_abs, tag = 'smem constant byte address 0x4 - core index']
  #allocation1 [shape = 'u32[144,128]{1,0:T(1,128)}', space=vmem, size = 0x12000, scoped, tag = 'internal scratch']
  %s0 = inlined_call_operand.vmem [shape: f32[8,16], index: 0, kind: input, shape index: {}]
  %s1 = inlined_call_operand.vmem [shape: f32[16,32], index: 1, kind: input, shape index: {}]
  %s2 = inlined_call_operand.vmem [shape: f32[1,32], index: 2, kind: input, shape index: {}]
  %s3 = inlined_call_operand.vmem [shape: f32[32,16], index: 3, kind: input, shape index: {}]
  %s4 = inlined_call_operand.vmem [shape: f32[1,16], index: 4, kind: input, shape index: {}]
  %s5 = inlined_call_operand.vmem [shape: f32[8,8], index: 5, kind: input, shape index: {}]
  %s6 = inlined_call_operand.hbm [shape: f32[8,16], index: 6, kind: output, shape index: {0}]
  %s7 = inlined_call_operand.hbm [shape: f32[8,8], index: 7, kind: output, shape index: {1}]
  %8 = xla_tuple %s6, %s7
  %s9 = sld [smem:[#allocation0]]
  $region50: #{tpu_custom_call.1} parent=0
    _
  %s11 = ssub.s32 1, %s9
  %s12 = scalar_select 0, %s11, %s9
  $region1: #{tpu_custom_call.1} parent=0
    #allocation2 [shape = 'u8[4096]{0}', space=vmem, size = 0x1000, scoped, tag = 'output window, operand 0, single buffered']
    #allocation3 [shape = 's32[1]{0}', space=sflag, size = 0x4, scoped, tag = 'scoped memory for tpu_custom_call.1']
    #allocation4 [shape = 'u8[4096]{0}', space=vmem, size = 0x1000, scoped, tag = 'output window, operand 1, single buffered']
    #allocation5 [shape = 's32[1]{0}', space=sflag, size = 0x4, scoped, tag = 'scoped memory for tpu_custom_call.1']
    %13 = vsyncpa [#allocation3], 0
    %14 = vsyncpa [#allocation5], 0
    // Predicated region
    $region2: #{tpu_custom_call.1} parent=1 // pred_check
      _
    $region3: #{tpu_custom_call.1} parent=1 // pred_check_branch
      %16 = sbr.rel (0) target = $region5
    $region4: #{tpu_custom_call.1} parent=1 // pred_region
      _
    $region5: #{tpu_custom_call.1} parent=1 // pred_fallthru
      _
    // Predicated region
    $region6: #{tpu_custom_call.1} parent=1 // pred_check
      _
    $region7: #{tpu_custom_call.1} parent=1 // pred_check_branch
      %18 = sbr.rel (0) target = $region9
    $region8: #{tpu_custom_call.1} parent=1 // pred_region
      _
    $region9: #{tpu_custom_call.1} parent=1 // pred_fallthru
      _
    // Predicated region
    $region10: #{tpu_custom_call.1} parent=1 // pred_check
      _
    $region11: #{tpu_custom_call.1} parent=1 // pred_check_branch
      %20 = sbr.rel (0) target = $region13
    $region12: #{tpu_custom_call.1} parent=1 // pred_region
      _
    $region13: #{tpu_custom_call.1} parent=1 // pred_fallthru
      _
    // Predicated region
    $region14: #{tpu_custom_call.1} parent=1 // pred_check
      _
    $region15: #{tpu_custom_call.1} parent=1 // pred_check_branch
      %22 = sbr.rel (0) target = $region17
    $region16: #{tpu_custom_call.1} parent=1 // pred_region
      _
    $region17: #{tpu_custom_call.1} parent=1 // pred_fallthru
      _
    // Predicated region
    $region18: #{tpu_custom_call.1} parent=1 // pred_check
      _
    $region19: #{tpu_custom_call.1} parent=1 // pred_check_branch
      %24 = sbr.rel (0) target = $region21
    $region20: #{tpu_custom_call.1} parent=1 // pred_region
      _
    $region21: #{tpu_custom_call.1} parent=1 // pred_fallthru
      _
    // Predicated region
    $region22: #{tpu_custom_call.1} parent=1 // pred_check
      _
    $region23: #{tpu_custom_call.1} parent=1 // pred_check_branch
      %26 = sbr.rel (0) target = $region25
    $region24: #{tpu_custom_call.1} parent=1 // pred_region
      _
    $region25: #{tpu_custom_call.1} parent=1 // pred_fallthru
      _
    %p27 = scmp.eq.s32.totalorder 0, 0
    // Predicated region
    $region26: #{tpu_custom_call.1} parent=1 // pred_check
      %p28 = pneg %p27
    $region27: #{tpu_custom_call.1} parent=1 // pred_check_branch
      %30 = sbr.rel (%p28) target = $region29
    $region28: #{tpu_custom_call.1} parent=1 // pred_region
      %vm31 = vcmask 130048
      %32 = vst.msk [vmem:[#allocation2] sm:$0xff] %vm31, 0.0
    $region29: #{tpu_custom_call.1} parent=1 // pred_fallthru
      _
    %v33 = vld [vmem:[%s0] sm:$0xff]
    %v34 = vld [vmem:[%s1] sm:$0xff]
    %v35 = vld [vmem:[%s1 + $0x8] sm:$0xff]
    %v36 = vld [vmem:[%s2] sm:$0x1]
    %v38 = vlaneseq
    %v39 = vshrl.u32 %v38, 7
    %v40 = vsub.s32 0, %v39
    %v41 = vrot.slane %v36, %v40
    %vm43 = vcmask 130048
    %v45 = vsel %vm43, %v33, 0
    %47 = vmatprep.subr.mxu0 0.0
    %48 = vmatpush1.msra.mxu0 %v34
    %49 = vmatprep.subr.mxu0 0.0
    %50 = vmatpush1.msra.mxu0 %v35
    %51 = vmatprep.subr.mxu0 0.0
    %52 = vmatpush1.msra.mxu0 0.0
    %53 = vmatprep.subr.mxu0 0.0
    %54 = vmatpush1.msra.mxu0 0.0
    %55 = vmatprep.subr.mxu0 0.0
    %56 = vmatpush1.msra.mxu0 0.0
    %57 = vmatprep.subr.mxu0 0.0
    %58 = vmatpush1.msra.mxu0 0.0
    %59 = vmatprep.subr.mxu0 0.0
    %60 = vmatpush1.msra.mxu0 0.0
    %61 = vmatprep.subr.mxu0 0.0
    %62 = vmatpush1.msra.mxu0 0.0
    %63 = vmatprep.subr.mxu0 0.0
    %64 = vmatpush1.msra.mxu0 0.0
    %65 = vmatprep.subr.mxu0 0.0
    %66 = vmatpush1.msra.mxu0 0.0
    %67 = vmatprep.subr.mxu0 0.0
    %68 = vmatpush1.msra.mxu0 0.0
    %69 = vmatprep.subr.mxu0 0.0
    %70 = vmatpush1.msra.mxu0 0.0
    %71 = vmatprep.subr.mxu0 0.0
    %72 = vmatpush1.msra.mxu0 0.0
    %73 = vmatprep.subr.mxu0 0.0
    %74 = vmatpush1.msra.mxu0 0.0
    %75 = vmatprep.subr.mxu0 0.0
    %76 = vmatpush1.msra.mxu0 0.0
    %77 = vmatprep.subr.mxu0 0.0
    %78 = vmatpush1.msra.mxu0 0.0
    %79 = vmatprep.subr.mxu0 0.0
    %80 = vmatpush1.msra.mxu0 0.0
    %81 = vmatprep.subr.mxu0 0.0
    %82 = vmatpush1.msra.mxu0 0.0
    %83 = vmatprep.subr.mxu0 0.0
    %84 = vmatpush1.msra.mxu0 0.0
    %85 = vmatprep.subr.mxu0 0.0
    %86 = vmatpush1.msra.mxu0 0.0
    %87 = vmatprep.subr.mxu0 0.0
    %88 = vmatpush1.msra.mxu0 0.0
    %89 = vmatprep.subr.mxu0 0.0
    %90 = vmatpush1.msra.mxu0 0.0
    %91 = vmatprep.subr.mxu0 0.0
    %92 = vmatpush1.msra.mxu0 0.0
    %93 = vmatprep.subr.mxu0 0.0
    %94 = vmatpush1.msra.mxu0 0.0
    %95 = vmatprep.subr.mxu0 0.0
    %96 = vmatpush1.msra.mxu0 0.0
    %97 = vmatprep.subr.mxu0 0.0
    %98 = vmatpush1.msra.mxu0 0.0
    %99 = vmatprep.subr.mxu0 0.0
    %100 = vmatpush1.msra.mxu0 0.0
    %101 = vmatprep.subr.mxu0 0.0
    %102 = vmatpush1.msra.mxu0 0.0
    %103 = vmatprep.subr.mxu0 0.0
    %104 = vmatpush1.msra.mxu0 0.0
    %105 = vmatprep.subr.mxu0 0.0
    %106 = vmatpush1.msra.mxu0 0.0
    %107 = vmatprep.subr.mxu0 0.0
    %108 = vmatpush1.msra.mxu0 0.0
    %109 = vmatprep.subr.mxu0 0.0
    %110 = vmatpush1.msra.mxu0 0.0
    %111 = vmatprep.mubr.f32.mxu0 0.0
    %112 = vmatmul.mubr.f32.gmra.mrb[0].mxu0 %v45
    %v113 = vpop.f32.mrb[0].mxu0
    %v114 = vadd.f32 %v41, %v113
    %v115 = vpop.f32.mrb[0].mxu0
    %116 = vdwg.mxu0
    %v117 = vmax.f32 %v114, 0.0
    %v118 = vld [vmem:[#allocation2] sm:$0xff]
    %v119 = vld [vmem:[%s3] sm:$0xff]
    %v120 = vld [vmem:[%s3 + $0x8] sm:$0xff]
    %v121 = vld [vmem:[%s3 + $0x10] sm:$0xff]
    %v122 = vld [vmem:[%s3 + $0x18] sm:$0xff]
    %vm123 = vcmask 261120
    %v125 = vsel %vm123, %v117, 0
    %127 = vmatprep.subr.mxu0 0.0
    %128 = vmatpush1.msra.mxu0 %v119
    %129 = vmatprep.subr.mxu0 0.0
    %130 = vmatpush1.msra.mxu0 %v120
    %131 = vmatprep.subr.mxu0 0.0
    %132 = vmatpush1.msra.mxu0 %v121
    %133 = vmatprep.subr.mxu0 0.0
    %134 = vmatpush1.msra.mxu0 %v122
    %135 = vmatprep.subr.mxu0 0.0
    %136 = vmatpush1.msra.mxu0 0.0
    %137 = vmatprep.subr.mxu0 0.0
    %138 = vmatpush1.msra.mxu0 0.0
    %139 = vmatprep.subr.mxu0 0.0
    %140 = vmatpush1.msra.mxu0 0.0
    %141 = vmatprep.subr.mxu0 0.0
    %142 = vmatpush1.msra.mxu0 0.0
    %143 = vmatprep.subr.mxu0 0.0
    %144 = vmatpush1.msra.mxu0 0.0
    %145 = vmatprep.subr.mxu0 0.0
    %146 = vmatpush1.msra.mxu0 0.0
    %147 = vmatprep.subr.mxu0 0.0
    %148 = vmatpush1.msra.mxu0 0.0
    %149 = vmatprep.subr.mxu0 0.0
    %150 = vmatpush1.msra.mxu0 0.0
    %151 = vmatprep.subr.mxu0 0.0
    %152 = vmatpush1.msra.mxu0 0.0
    %153 = vmatprep.subr.mxu0 0.0
    %154 = vmatpush1.msra.mxu0 0.0
    %155 = vmatprep.subr.mxu0 0.0
    %156 = vmatpush1.msra.mxu0 0.0
    %157 = vmatprep.subr.mxu0 0.0
    %158 = vmatpush1.msra.mxu0 0.0
    %159 = vmatprep.subr.mxu0 0.0
    %160 = vmatpush1.msra.mxu0 0.0
    %161 = vmatprep.subr.mxu0 0.0
    %162 = vmatpush1.msra.mxu0 0.0
    %163 = vmatprep.subr.mxu0 0.0
    %164 = vmatpush1.msra.mxu0 0.0
    %165 = vmatprep.subr.mxu0 0.0
    %166 = vmatpush1.msra.mxu0 0.0
    %167 = vmatprep.subr.mxu0 0.0
    %168 = vmatpush1.msra.mxu0 0.0
    %169 = vmatprep.subr.mxu0 0.0
    %170 = vmatpush1.msra.mxu0 0.0
    %171 = vmatprep.subr.mxu0 0.0
    %172 = vmatpush1.msra.mxu0 0.0
    %173 = vmatprep.subr.mxu0 0.0
    %174 = vmatpush1.msra.mxu0 0.0
    %175 = vmatprep.subr.mxu0 0.0
    %176 = vmatpush1.msra.mxu0 0.0
    %177 = vmatprep.subr.mxu0 0.0
    %178 = vmatpush1.msra.mxu0 0.0
    %179 = vmatprep.subr.mxu0 0.0
    %180 = vmatpush1.msra.mxu0 0.0
    %181 = vmatprep.subr.mxu0 0.0
    %182 = vmatpush1.msra.mxu0 0.0
    %183 = vmatprep.subr.mxu0 0.0
    %184 = vmatpush1.msra.mxu0 0.0
    %185 = vmatprep.subr.mxu0 0.0
    %186 = vmatpush1.msra.mxu0 0.0
    %187 = vmatprep.subr.mxu0 0.0
    %188 = vmatpush1.msra.mxu0 0.0
    %189 = vmatprep.subr.mxu0 0.0
    %190 = vmatpush1.msra.mxu0 0.0
    %191 = vmatprep.mubr.f32.mxu0 0.0
    %192 = vmatmul.mubr.f32.gmra.mrb[0].mxu0 %v125
    %v193 = vpop.f32.mrb[0].mxu0
    %v194 = vadd.f32 0.0, %v193
    %v195 = vpop.f32.mrb[0].mxu0
    %196 = vdwg.mxu0
    %v197 = vadd.f32 %v118, %v194
    %198 = vst.msk [vmem:[#allocation2] sm:$0xff] %vm43, %v197
    // Predicated region
    $region30: #{tpu_custom_call.1} parent=1 // pred_check
      %p199 = pneg %p27
    $region31: #{tpu_custom_call.1} parent=1 // pred_check_branch
      %201 = sbr.rel (%p199) target = $region33
    $region32: #{tpu_custom_call.1} parent=1 // pred_region
      %v202 = vld [vmem:[#allocation2] sm:$0xff]
      %v203 = vld [vmem:[%s4] sm:$0x1]
      %v205 = vlaneseq
      %v206 = vshrl.u32 %v205, 7
      %v207 = vsub.s32 0, %v206
      %v208 = vrot.slane %v203, %v207
      %v210 = vadd.f32 %v202, %v208
      %211 = vst.msk [vmem:[#allocation2] sm:$0xff] %vm43, %v210
      %v212 = vmul.f32 %v210, 0.5
      %v213 = vmul.f32 %v212, 1.442695
      %v214 = vpow.pop %v213
      %v215 = vld [vmem:[%s5] sm:$0xff]
      %v216 = vmul.f32 %v214, %v215
      %218 = vrot.lane.b32.xlu0 %v210, 120
      %v219 = vpop.permute.xlu0 %218
      %v221 = vadd.f32 %v216, %v219
      %vm222 = vcmask 64512
      %223 = vst.msk [vmem:[#allocation4] sm:$0xff] %vm222, %v221
    $region33: #{tpu_custom_call.1} parent=1 // pred_fallthru
      _
    // Predicated region
    $region34: #{tpu_custom_call.1} parent=1 // pred_check
      _
    $region35: #{tpu_custom_call.1} parent=1 // pred_check_branch
      %225 = sbr.rel (0) target = $region37
    $region36: #{tpu_custom_call.1} parent=1 // pred_region
      %s227 = ssub.s32 128, 128
      %228 = vsyncadd [#allocation3], %s227
      %s230 = sshll.u32 [#allocation2], 4
      %s231 = int_to_ptr.vmem [resolvable:$true] %s230
      %233 = dma.vmem_to_hbm [thread:$0]  %s231, 128, %s6, [#allocation3]
    $region37: #{tpu_custom_call.1} parent=1 // pred_fallthru
      _
    // Predicated region
    $region38: #{tpu_custom_call.1} parent=1 // pred_check
      _
    $region39: #{tpu_custom_call.1} parent=1 // pred_check_branch
      %235 = sbr.rel (0) target = $region41
    $region40: #{tpu_custom_call.1} parent=1 // pred_region
      %s237 = ssub.s32 128, 128
      %238 = vsyncadd [#allocation5], %s237
      %s240 = sshll.u32 [#allocation4], 4
      %s241 = int_to_ptr.vmem [resolvable:$true] %s240
      %243 = dma.vmem_to_hbm [thread:$0]  %s241, 128, %s7, [#allocation5]
    $region41: #{tpu_custom_call.1} parent=1 // pred_fallthru
      _
    // Predicated region
    $region42: #{tpu_custom_call.1} parent=1 // pred_check
      _
    $region43: #{tpu_custom_call.1} parent=1 // pred_check_branch
      %245 = sbr.rel (0) target = $region45
    $region44: #{tpu_custom_call.1} parent=1 // pred_region
      %246 = dma.done [#allocation3], 128
    $region45: #{tpu_custom_call.1} parent=1 // pred_fallthru
      _
    // Predicated region
    $region46: #{tpu_custom_call.1} parent=1 // pred_check
      _
    $region47: #{tpu_custom_call.1} parent=1 // pred_check_branch
      %248 = sbr.rel (0) target = $region49
    $region48: #{tpu_custom_call.1} parent=1 // pred_region
      %249 = dma.done [#allocation5], 128
    $region49: #{tpu_custom_call.1} parent=1 // pred_fallthru
      _
    %250 = vsyncpa [#allocation3], 1
    %251 = vsyncpa [#allocation5], 1

</llo_original>
